<compile_context>
chip_gen: v7x
topology: tpu7x:2x2x1
jax: 0.10.0
libtpu: 0.0.40
codegen_flags: <defaults>
</compile_context>

<pallas_src>
import functools

import jax
import jax.numpy as jnp
from jax.experimental import pallas as pl
from jax.experimental.pallas import tpu as pltpu

EPS = 1e-5  # nn.BatchNorm1d default eps


def _round_up(a, m):
    return (a + m - 1) // m * m


def _global_model_kernel(aggr, hs,
                         batch_ref, x_ref, u_ref,
                         w1u_ref, w1x_ref, b1_ref,
                         w2_ref, b2_ref,
                         o_ref, acc_ref):
    k = pl.program_id(1)
    nk = pl.num_programs(1)
    TB = o_ref.shape[0]
    TN = batch_ref.shape[1]
    b0 = pl.program_id(0) * TB

    @pl.when(k == 0)
    def _init():
        if aggr == "max":
            acc_ref[...] = jnp.full(acc_ref.shape, -jnp.inf, acc_ref.dtype)
        else:
            acc_ref[...] = jnp.zeros(acc_ref.shape, acc_ref.dtype)

    batch = batch_ref[...]                                      # (1, TN) int32
    seg = b0 + jax.lax.broadcasted_iota(jnp.int32, (TB, TN), 0)  # (TB, TN)
    member = seg == batch                                       # (TB, TN) bool

    if aggr == "max":
        # running max over node tiles into a (TB, x_ind) scratch
        xf = x_ref[...].astype(jnp.float32)                     # (TN, x_ind)
        masked = jnp.where(member[:, :, None], xf[None, :, :], -jnp.inf)
        acc_ref[...] = jnp.maximum(acc_ref[...], jnp.max(masked, axis=1))
    else:
        # reassociated pooling: (onehot @ (x @ W1x)) accumulated in f32
        onehot = member.astype(jnp.bfloat16)                    # exact 0/1
        y = jnp.dot(x_ref[...], w1x_ref[...],
                    preferred_element_type=jnp.float32)          # (TN, hs_pad)
        acc_ref[...] += jnp.dot(onehot, y.astype(jnp.bfloat16),
                                preferred_element_type=jnp.float32)

    @pl.when(k == nk - 1)
    def _finish():
        acc = acc_ref[...]
        if aggr == "max":
            hx = jnp.dot(acc.astype(jnp.bfloat16), w1x_ref[...],
                         preferred_element_type=jnp.float32)     # (TB, hs_pad)
        elif aggr == "mean":
            counts = jnp.maximum(acc[:, hs:hs + 1], 1.0)         # counts lane
            hx = acc / counts
        else:  # "add"
            hx = acc

        # Conv1d(k=1) #1 (+ folded BN1) + ReLU.  Dropout = identity (eval).
        h = (jnp.dot(u_ref[...], w1u_ref[...], preferred_element_type=jnp.float32)
             + hx + b1_ref[...])
        h = jnp.maximum(h, 0.0)
        # TODO(synk): training-mode Dropout (RNG) / BN batch-stats not implemented.

        # Conv1d(k=1) #2 (+ folded BN2).
        out = (jnp.dot(h.astype(jnp.bfloat16), w2_ref[...],
                       preferred_element_type=jnp.float32) + b2_ref[...])
        o_ref[...] = out.astype(o_ref.dtype)


def global_model_forward(x, u, batch, params, *, aggr="mean", tn=512, tb=256):
    """x: [N, x_ind] node feats, u: [B, u_ind] global feats, batch: [N] graph ids."""
    if aggr not in ("add", "mean", "max"):
        raise ValueError(f"unknown aggr {aggr!r}")
    N, x_ind = x.shape
    B, u_ind = u.shape
    hs = params["w2"].shape[0]

    # ---- fold eval-mode BatchNorm + conv biases into effective weights ----
    s1 = params["g1"] / jnp.sqrt(params["v1"] + EPS)
    s2 = params["g2"] / jnp.sqrt(params["v2"] + EPS)
    w1_eff = params["w1"] * s1[:, None]                  # (hs, u_ind + x_ind)
    b1_eff = s1 * (params["b1"] - params["m1"]) + params["beta1"]
    w2_eff = params["w2"] * s2[:, None]                  # (hs, hs)
    b2_eff = s2 * (params["b2"] - params["m2"]) + params["beta2"]

    need_counts = aggr == "mean"
    hs_pad = _round_up(hs + (1 if need_counts else 0), 128)   # lane-dense output
    x_cols = x_ind + (1 if need_counts else 0)                # + ones column

    TN = _round_up(min(tn, _round_up(N, 128)), 128)
    N_pad = _round_up(N, TN)
    TB = _round_up(min(tb, _round_up(B, 8)), 8)
    B_pad = _round_up(B, TB)

    # ---- padded / packed inputs (bf16 for the heavy operands) ----
    x_p = jnp.zeros((N_pad, x_cols), jnp.float32).at[:N, :x_ind].set(
        x.astype(jnp.float32))
    if need_counts:
        x_p = x_p.at[:, x_ind].set(1.0)                  # counts column
    x_p = x_p.astype(jnp.bfloat16)

    batch_p = jnp.full((1, N_pad), -1, jnp.int32).at[0, :N].set(
        batch.astype(jnp.int32))
    u_p = jnp.zeros((B_pad, u_ind), jnp.float32).at[:B].set(u.astype(jnp.float32))

    w1u_p = jnp.zeros((u_ind, hs_pad), jnp.float32).at[:, :hs].set(
        w1_eff[:, :u_ind].T)
    w1x_p = jnp.zeros((x_cols, hs_pad), jnp.float32).at[:x_ind, :hs].set(
        w1_eff[:, u_ind:].T)
    if need_counts:
        w1x_p = w1x_p.at[x_ind, hs].set(1.0)             # ones column -> counts lane
    w1x_p = w1x_p.astype(jnp.bfloat16)

    b1_p = jnp.zeros((1, hs_pad), jnp.float32).at[0, :hs].set(b1_eff)
    w2_p = jnp.zeros((hs_pad, hs_pad), jnp.float32).at[:hs, :hs].set(
        w2_eff.T).astype(jnp.bfloat16)
    b2_p = jnp.zeros((1, hs_pad), jnp.float32).at[0, :hs].set(b2_eff)

    acc_cols = x_ind if aggr == "max" else hs_pad
    grid = (B_pad // TB, N_pad // TN)

    out = pl.pallas_call(
        functools.partial(_global_model_kernel, aggr, hs),
        grid=grid,
        in_specs=[
            pl.BlockSpec((1, TN), lambda b, k: (0, k)),           # batch ids
            pl.BlockSpec((TN, x_cols), lambda b, k: (k, 0)),      # node features
            pl.BlockSpec((TB, u_ind), lambda b, k: (b, 0)),       # global features
            pl.BlockSpec((u_ind, hs_pad), lambda b, k: (0, 0)),   # W1 (u part, folded)
            pl.BlockSpec((x_cols, hs_pad), lambda b, k: (0, 0)),  # W1 (x part, folded)
            pl.BlockSpec((1, hs_pad), lambda b, k: (0, 0)),       # b1 (folded)
            pl.BlockSpec((hs_pad, hs_pad), lambda b, k: (0, 0)),  # W2 (folded)
            pl.BlockSpec((1, hs_pad), lambda b, k: (0, 0)),       # b2 (folded)
        ],
        out_specs=pl.BlockSpec((TB, hs_pad), lambda b, k: (b, 0)),
        out_shape=jax.ShapeDtypeStruct((B_pad, hs_pad), jnp.float32),
        scratch_shapes=[pltpu.VMEM((TB, acc_cols), jnp.float32)],
        compiler_params=pltpu.CompilerParams(
            dimension_semantics=("parallel", "arbitrary")),
    )(batch_p, x_p, u_p, w1u_p, w1x_p, b1_p, w2_p, b2_p)

    return out[:B, :hs]


def reference_forward(x, u, batch, params, *, aggr="mean"):
    """Plain-JAX f32 reference matching the PyTorch forward (eval-mode BN/Dropout)."""
    B = u.shape[0]
    member = jnp.arange(B)[:, None] == batch[None, :]
    onehot = member.astype(jnp.float32)
    if aggr == "add":
        pooled = onehot @ x
    elif aggr == "mean":
        pooled = (onehot @ x) / jnp.maximum(onehot.sum(1, keepdims=True), 1.0)
    elif aggr == "max":
        pooled = jnp.where(member[:, :, None], x[None, :, :], -jnp.inf).max(1)
    else:
        raise ValueError(aggr)
    h = jnp.concatenate([u, pooled], axis=1)
    h = h @ params["w1"].T + params["b1"]
    h = (h - params["m1"]) / jnp.sqrt(params["v1"] + EPS) * params["g1"] + params["beta1"]
    h = jnp.maximum(h, 0.0)
    h = h @ params["w2"].T + params["b2"]
    h = (h - params["m2"]) / jnp.sqrt(params["v2"] + EPS) * params["g2"] + params["beta2"]
    return h


def init_params(key, x_ind, u_ind, hs):
    cin = x_ind + u_ind
    ks = jax.random.split(key, 12)
    return dict(
        w1=0.2 * jax.random.normal(ks[0], (hs, cin), jnp.float32),
        b1=0.1 * jax.random.normal(ks[1], (hs,), jnp.float32),
        g1=1.0 + 0.1 * jax.random.normal(ks[2], (hs,), jnp.float32),
        beta1=0.1 * jax.random.normal(ks[3], (hs,), jnp.float32),
        m1=0.1 * jax.random.normal(ks[4], (hs,), jnp.float32),
        v1=1.0 + 0.1 * jnp.abs(jax.random.normal(ks[5], (hs,), jnp.float32)),
        w2=0.2 * jax.random.normal(ks[6], (hs, hs), jnp.float32),
        b2=0.1 * jax.random.normal(ks[7], (hs,), jnp.float32),
        g2=1.0 + 0.1 * jax.random.normal(ks[8], (hs,), jnp.float32),
        beta2=0.1 * jax.random.normal(ks[9], (hs,), jnp.float32),
        m2=0.1 * jax.random.normal(ks[10], (hs,), jnp.float32),
        v2=1.0 + 0.1 * jnp.abs(jax.random.normal(ks[11], (hs,), jnp.float32)),
    )


if __name__ == "__main__":
    # Small but multi-tile: 4 graphs, 300 nodes (-> 3 node tiles of 128), hidden=32.
    B, N, x_ind, u_ind, hs = 4, 300, 6, 5, 32
    key = jax.random.PRNGKey(0)
    kx, ku, kb, kp = jax.random.split(key, 4)

    x = jax.random.normal(kx, (N, x_ind), jnp.float32)
    u = jax.random.normal(ku, (B, u_ind), jnp.float32)
    batch = jax.random.randint(kb, (N,), 0, B).astype(jnp.int32)
    params = init_params(kp, x_ind, u_ind, hs)

    for aggr in ("mean", "add", "max"):
        out = jax.block_until_ready(
            global_model_forward(x, u, batch, params, aggr=aggr, tn=128, tb=256))
        ref = reference_forward(x, u, batch, params, aggr=aggr)
        assert out.shape == (B, hs), (aggr, out.shape)
        denom = float(jnp.maximum(jnp.max(jnp.abs(ref)), 1.0))
        rel_err = float(jnp.max(jnp.abs(out - ref))) / denom
        # bf16 inputs with f32 accumulation -> ~1e-2 relative tolerance.
        assert rel_err < 2e-2, (aggr, rel_err)

    print("KERNEL_OK")
</pallas_src>

<mosaic_0001>
module attributes {stable_mosaic.version = 11 : i64} {
  func.func @_global_model_kernel(%arg0: i32, %arg1: i32, %arg2: memref<1x128xi32, #tpu.memory_space<vmem>>, %arg3: memref<128x7xbf16, #tpu.memory_space<vmem>>, %arg4: memref<8x5xf32, #tpu.memory_space<vmem>>, %arg5: memref<5x128xf32, #tpu.memory_space<vmem>>, %arg6: memref<7x128xbf16, #tpu.memory_space<vmem>>, %arg7: memref<1x128xf32, #tpu.memory_space<vmem>>, %arg8: memref<128x128xbf16, #tpu.memory_space<vmem>>, %arg9: memref<1x128xf32, #tpu.memory_space<vmem>>, %arg10: memref<8x128xf32, #tpu.memory_space<vmem>>, %arg11: memref<8x128xf32, #tpu.memory_space<vmem>>) attributes {dimension_semantics = [#tpu.dimension_semantics<parallel>, #tpu.dimension_semantics<arbitrary>], iteration_bounds = array<i64: 1, 3>, scalar_prefetch = 0 : i64, scratch_operands = 1 : i64, tpu.core_type = #tpu.core_type<tc>, window_params = [{transform_indices = @transform_0, window_bounds = array<i64: 1, 128>}, {transform_indices = @transform_1, window_bounds = array<i64: 128, 7>}, {transform_indices = @transform_2, window_bounds = array<i64: 8, 5>}, {pipeline_mode = #tpu.pipeline_mode<synchronous>, transform_indices = @transform_3, window_bounds = array<i64: 5, 128>}, {pipeline_mode = #tpu.pipeline_mode<synchronous>, transform_indices = @transform_4, window_bounds = array<i64: 7, 128>}, {pipeline_mode = #tpu.pipeline_mode<synchronous>, transform_indices = @transform_5, window_bounds = array<i64: 1, 128>}, {pipeline_mode = #tpu.pipeline_mode<synchronous>, transform_indices = @transform_6, window_bounds = array<i64: 128, 128>}, {pipeline_mode = #tpu.pipeline_mode<synchronous>, transform_indices = @transform_7, window_bounds = array<i64: 1, 128>}, {transform_indices = @transform_8, window_bounds = array<i64: 8, 128>}]} {
    %c8_i32 = arith.constant 8 : i32
    %0 = arith.muli %arg0, %c8_i32 : i32
    %c0_i32 = arith.constant 0 : i32
    %1 = arith.cmpi eq, %arg1, %c0_i32 : i32
    %2 = arith.extui %1 : i1 to i32
    %c0_i32_0 = arith.constant 0 : i32
    %3 = arith.cmpi ne, %2, %c0_i32_0 : i32
    scf.if %3 {
      %cst_12 = arith.constant 0.000000e+00 : f32
      %24 = vector.broadcast %cst_12 : f32 to vector<8x128xf32>
      %c0_13 = arith.constant 0 : index
      %c0_14 = arith.constant 0 : index
      %25 = vector.load %arg11[%c0_13, %c0_14] : memref<8x128xf32, #tpu.memory_space<vmem>>, vector<8x128xf32>
      tpu.vector_store %arg11[%c0_13, %c0_14], %24 {strides = array<i32>} : memref<8x128xf32, #tpu.memory_space<vmem>>, vector<8x128xf32>,
    } else {
    }
    %c0 = arith.constant 0 : index
    %c0_1 = arith.constant 0 : index
    %4 = vector.load %arg2[%c0, %c0_1] : memref<1x128xi32, #tpu.memory_space<vmem>>, vector<1x128xi32>
    %5 = tpu.iota {dimensions = array<i32: 0>} : vector<8x128xi32>
    %6 = vector.broadcast %0 : i32 to vector<8x128xi32>
    %7 = arith.addi %6, %5 : vector<8x128xi32>
    %8 = vector.broadcast %4 : vector<1x128xi32> to vector<8x128xi32>
    %9 = arith.cmpi eq, %7, %8 : vector<8x128xi32>
    %10 = arith.extui %9 : vector<8x128xi1> to vector<8x128xi32>
    %11 = arith.sitofp %10 : vector<8x128xi32> to vector<8x128xf32>
    %12 = arith.truncf %11 : vector<8x128xf32> to vector<8x128xbf16>
    %c0_2 = arith.constant 0 : index
    %c0_3 = arith.constant 0 : index
    %13 = vector.load %arg3[%c0_2, %c0_3] : memref<128x7xbf16, #tpu.memory_space<vmem>>, vector<128x7xbf16>
    %c0_4 = arith.constant 0 : index
    %c0_5 = arith.constant 0 : index
    %14 = vector.load %arg6[%c0_4, %c0_5] : memref<7x128xbf16, #tpu.memory_space<vmem>>, vector<7x128xbf16>
    %cst = arith.constant dense<0.000000e+00> : vector<128x128xf32>
    %15 = tpu.matmul %13, %14, %cst {dimension_numbers = #tpu.dot_dimension_numbers<[1], [0], [0], [1], [0, 0, 1, 1], [], []>} : vector<128x7xbf16>, vector<7x128xbf16>, vector<128x128xf32> -> vector<128x128xf32>
    %c0_6 = arith.constant 0 : index
    %c0_7 = arith.constant 0 : index
    %16 = vector.load %arg11[%c0_6, %c0_7] : memref<8x128xf32, #tpu.memory_space<vmem>>, vector<8x128xf32>
    %17 = arith.truncf %15 : vector<128x128xf32> to vector<128x128xbf16>
    %cst_8 = arith.constant dense<0.000000e+00> : vector<8x128xf32>
    %18 = tpu.matmul %12, %17, %cst_8 {dimension_numbers = #tpu.dot_dimension_numbers<[1], [0], [0], [1], [0, 0, 1, 1], [], []>} : vector<8x128xbf16>, vector<128x128xbf16>, vector<8x128xf32> -> vector<8x128xf32>
    %19 = arith.addf %16, %18 : vector<8x128xf32>
    %c0_9 = arith.constant 0 : index
    %c0_10 = arith.constant 0 : index
    %20 = vector.load %arg11[%c0_9, %c0_10] : memref<8x128xf32, #tpu.memory_space<vmem>>, vector<8x128xf32>
    tpu.vector_store %arg11[%c0_9, %c0_10], %19 {strides = array<i32>} : memref<8x128xf32, #tpu.memory_space<vmem>>, vector<8x128xf32>,
    %c2_i32 = arith.constant 2 : i32
    %21 = arith.cmpi eq, %arg1, %c2_i32 : i32
    %22 = arith.extui %21 : i1 to i32
    %c0_i32_11 = arith.constant 0 : i32
    %23 = arith.cmpi ne, %22, %c0_i32_11 : i32
    scf.if %23 {
      %c0_12 = arith.constant 0 : index
      %c0_13 = arith.constant 0 : index
      %24 = vector.load %arg11[%c0_12, %c0_13] : memref<8x128xf32, #tpu.memory_space<vmem>>, vector<8x128xf32>
      %25 = vector.extract_strided_slice %24 {offsets = [0, 32], sizes = [8, 1], strides = [1, 1]} : vector<8x128xf32> to vector<8x1xf32>
      %cst_14 = arith.constant 1.000000e+00 : f32
      %26 = vector.broadcast %cst_14 : f32 to vector<8x1xf32>
      %27 = arith.maximumf %25, %26 : vector<8x1xf32>
      %28 = vector.broadcast %27 : vector<8x1xf32> to vector<8x128xf32>
      %29 = arith.divf %24, %28 : vector<8x128xf32>
      %c0_15 = arith.constant 0 : index
      %c0_16 = arith.constant 0 : index
      %30 = vector.load %arg4[%c0_15, %c0_16] : memref<8x5xf32, #tpu.memory_space<vmem>>, vector<8x5xf32>
      %c0_17 = arith.constant 0 : index
      %c0_18 = arith.constant 0 : index
      %31 = vector.load %arg5[%c0_17, %c0_18] : memref<5x128xf32, #tpu.memory_space<vmem>>, vector<5x128xf32>
      %cst_19 = arith.constant dense<0.000000e+00> : vector<8x128xf32>
      %32 = tpu.matmul %30, %31, %cst_19 {dimension_numbers = #tpu.dot_dimension_numbers<[1], [0], [0], [1], [0, 0, 1, 1], [], []>} : vector<8x5xf32>, vector<5x128xf32>, vector<8x128xf32> -> vector<8x128xf32>
      %33 = arith.addf %32, %29 : vector<8x128xf32>
      %c0_20 = arith.constant 0 : index
      %c0_21 = arith.constant 0 : index
      %34 = vector.load %arg7[%c0_20, %c0_21] : memref<1x128xf32, #tpu.memory_space<vmem>>, vector<1x128xf32>
      %35 = vector.broadcast %34 : vector<1x128xf32> to vector<8x128xf32>
      %36 = arith.addf %33, %35 : vector<8x128xf32>
      %cst_22 = arith.constant 0.000000e+00 : f32
      %37 = vector.broadcast %cst_22 : f32 to vector<8x128xf32>
      %38 = arith.maximumf %36, %37 : vector<8x128xf32>
      %39 = arith.truncf %38 : vector<8x128xf32> to vector<8x128xbf16>
      %c0_23 = arith.constant 0 : index
      %c0_24 = arith.constant 0 : index
      %40 = vector.load %arg8[%c0_23, %c0_24] : memref<128x128xbf16, #tpu.memory_space<vmem>>, vector<128x128xbf16>
      %cst_25 = arith.constant dense<0.000000e+00> : vector<8x128xf32>
      %41 = tpu.matmul %39, %40, %cst_25 {dimension_numbers = #tpu.dot_dimension_numbers<[1], [0], [0], [1], [0, 0, 1, 1], [], []>} : vector<8x128xbf16>, vector<128x128xbf16>, vector<8x128xf32> -> vector<8x128xf32>
      %c0_26 = arith.constant 0 : index
      %c0_27 = arith.constant 0 : index
      %42 = vector.load %arg9[%c0_26, %c0_27] : memref<1x128xf32, #tpu.memory_space<vmem>>, vector<1x128xf32>
      %43 = vector.broadcast %42 : vector<1x128xf32> to vector<8x128xf32>
      %44 = arith.addf %41, %43 : vector<8x128xf32>
      %c0_28 = arith.constant 0 : index
      %c0_29 = arith.constant 0 : index
      %45 = vector.load %arg10[%c0_28, %c0_29] : memref<8x128xf32, #tpu.memory_space<vmem>>, vector<8x128xf32>
      tpu.vector_store %arg10[%c0_28, %c0_29], %44 {strides = array<i32>} : memref<8x128xf32, #tpu.memory_space<vmem>>, vector<8x128xf32>,
    } else {
    }
    return
  }
  func.func @transform_0(%arg0: i32, %arg1: i32) -> (i32, i32) {
    %c0_i32 = arith.constant 0 : i32
    %c0_i32_0 = arith.constant 0 : i32
    return %c0_i32, %arg1 : i32, i32
  }
  func.func @transform_1(%arg0: i32, %arg1: i32) -> (i32, i32) {
    %c0_i32 = arith.constant 0 : i32
    %c0_i32_0 = arith.constant 0 : i32
    return %arg1, %c0_i32 : i32, i32
  }
  func.func @transform_2(%arg0: i32, %arg1: i32) -> (i32, i32) {
    %c0_i32 = arith.constant 0 : i32
    %c0_i32_0 = arith.constant 0 : i32
    return %arg0, %c0_i32 : i32, i32
  }
  func.func @transform_3(%arg0: i32, %arg1: i32) -> (i32, i32) {
    %c0_i32 = arith.constant 0 : i32
    %c0_i32_0 = arith.constant 0 : i32
    %c0_i32_1 = arith.constant 0 : i32
    return %c0_i32, %c0_i32_0 : i32, i32
  }
  func.func @transform_4(%arg0: i32, %arg1: i32) -> (i32, i32) {
    %c0_i32 = arith.constant 0 : i32
    %c0_i32_0 = arith.constant 0 : i32
    %c0_i32_1 = arith.constant 0 : i32
    return %c0_i32, %c0_i32_0 : i32, i32
  }
  func.func @transform_5(%arg0: i32, %arg1: i32) -> (i32, i32) {
    %c0_i32 = arith.constant 0 : i32
    %c0_i32_0 = arith.constant 0 : i32
    %c0_i32_1 = arith.constant 0 : i32
    return %c0_i32, %c0_i32_0 : i32, i32
  }
  func.func @transform_6(%arg0: i32, %arg1: i32) -> (i32, i32) {
    %c0_i32 = arith.constant 0 : i32
    %c0_i32_0 = arith.constant 0 : i32
    %c0_i32_1 = arith.constant 0 : i32
    return %c0_i32, %c0_i32_0 : i32, i32
  }
  func.func @transform_7(%arg0: i32, %arg1: i32) -> (i32, i32) {
    %c0_i32 = arith.constant 0 : i32
    %c0_i32_0 = arith.constant 0 : i32
    %c0_i32_1 = arith.constant 0 : i32
    return %c0_i32, %c0_i32_0 : i32, i32
  }
  func.func @transform_8(%arg0: i32, %arg1: i32) -> (i32, i32) {
    %c0_i32 = arith.constant 0 : i32
    %c0_i32_0 = arith.constant 0 : i32
    return %arg0, %c0_i32 : i32, i32
  }
}

</mosaic_0001>

<llo_original>
// kernel: tpu_custom_call.1
$region0: #{tpu_custom_call.1}
  #allocation0 [shape = 'u32[]', space=smem, size = 0x4, offset = 0x4, fixed_abs, tag = 'smem constant byte address 0x4 - core index']
  #allocation1 [shape = 'u32[144,128]{1,0:T(1,128)}', space=vmem, size = 0x12000, scoped, tag = 'internal scratch']
  #allocation2 [shape = 'f32[8,128]{1,0:T(8,128)}', space=vmem, size = 0x1000, scoped, tag = 'scratch operand']
  %s0 = inlined_call_operand.vmem [shape: s32[1,384], index: 0, kind: input, shape index: {}]
  %s1 = inlined_call_operand.vmem [shape: bf16[384,7], index: 1, kind: input, shape index: {}]
  %s2 = inlined_call_operand.vmem [shape: f32[8,5], index: 2, kind: input, shape index: {}]
  %s3 = inlined_call_operand.vmem [shape: f32[5,128], index: 3, kind: input, shape index: {}]
  %s4 = inlined_call_operand.vmem [shape: bf16[7,128], index: 4, kind: input, shape index: {}]
  %s5 = inlined_call_operand.vmem [shape: f32[1,128], index: 5, kind: input, shape index: {}]
  %s6 = inlined_call_operand.vmem [shape: bf16[128,128], index: 6, kind: input, shape index: {}]
  %s7 = inlined_call_operand.vmem [shape: f32[1,128], index: 7, kind: input, shape index: {}]
  %s8 = inlined_call_operand.hbm [shape: f32[8,128], index: 8, kind: output, shape index: {}]
  %s9 = sld [smem:[#allocation0]]
  $region73: #{tpu_custom_call.1} parent=0
    _
  %s11 = ssub.s32 1, %s9
  %s12 = scalar_select 0, %s11, %s9
  $region1: #{tpu_custom_call.1} parent=0
    #allocation3 [shape = 'u8[4096]{0}', space=vmem, size = 0x1000, scoped, tag = 'output window, operand 0, single buffered']
    #allocation4 [shape = 's32[2]{0}', space=sflag, size = 0x8, scoped, tag = 'scoped memory for tpu_custom_call.1']
    %13 = vsyncpa [#allocation4], 0
    loop: start=0, step=1, limit=5
    $region2: #{tpu_custom_call.1} parent=1 // loop_pre_header
      _
    $region3: #{tpu_custom_call.1} parent=1 // loop_header
      %s15 = sphi 0, %s19
      %p16 = scmp.ge.s32.totalorder %s15, 5
      %s22 = sphi 0, %s34
      %s23 = sphi 0, %s30
      %s24 = sphi 0, %s22
      %s25 = sphi 0, %s23
      %s26 = sphi 0, %s24
      %s27 = sphi 0, %s25
      %s37 = sphi 0, %s39
      %s40 = sphi 0, %s37
      %s41 = sphi 0, %s40
      %s57 = sphi 0, %s41
      %s63 = sphi 0, %s65
      %s66 = sphi 0, %s63
      %s67 = sphi 0, %s66
      %s83 = sphi 0, %s67
      %s89 = sphi 0, %s91
      %s92 = sphi 0, %s89
      %s93 = sphi 0, %s92
      %s109 = sphi 0, %s93
      %s113 = sphi 0, %s113
      %s115 = sphi 0, %s113
      %s116 = sphi 0, %s115
      %s130 = sphi 0, %s116
      %s134 = sphi 0, %s134
      %s136 = sphi 0, %s134
      %s137 = sphi 0, %s136
      %s151 = sphi 0, %s137
      %s155 = sphi 0, %s155
      %s157 = sphi 0, %s155
      %s158 = sphi 0, %s157
      %s172 = sphi 0, %s158
      %s176 = sphi 0, %s176
      %s178 = sphi 0, %s176
      %s179 = sphi 0, %s178
      %s193 = sphi 0, %s179
      %s197 = sphi 0, %s197
      %s199 = sphi 0, %s197
      %s200 = sphi 0, %s199
      %s214 = sphi 0, %s200
      %s220 = sphi 0, %s222
      %s223 = sphi 0, %s220
      %s224 = sphi 0, %s223
      %s240 = sphi 0, %s224
    $region4: #{tpu_custom_call.1} parent=1 // loop_header_branch
      %18 = sbr.rel (%p16) target = $region8
    $region5: #{tpu_custom_call.1} parent=1 // loop_body
      %s20 = ssub.s32 %s15, 1
      %s21 = ssub.s32 %s15, 2
      %s28 = sadd.s32 1, %s23
      %p29 = scmp.ge.s32.totalorder %s28, 3
      %s30 = scalar_select %p29, 0, %s28
      %s31 = sadd.s32 1, %s22
      %s32 = scalar_select %p29, %s31, %s22
      %p33 = scmp.ge.s32.totalorder %s32, 1
      %s34 = scalar_select %p33, 0, %s32
      %s35 = ssub.s32 %s23, %s30
      %p36 = scmp.eq.s32.totalorder %s35, 0
      %s38 = sadd.s32 %s37, 1
      %s39 = scalar_select %p36, %s37, %s38
      %p42 = pneg %p36
      %p43 = scmp.eq.s32.totalorder %s15, 2
      %p44 = por %p42, %p43
      %p45 = scmp.ne.s32.totalorder %s37, %s40
      %p46 = scmp.eq.s32.totalorder %s15, 0
      %p47 = por %p45, %p46
      %p48 = scmp.ne.s32.totalorder %s37, %s40
      %p49 = scmp.eq.s32.totalorder %s20, 2
      %p50 = por %p48, %p49
      %p51 = scmp.ne.s32.totalorder %s40, %s41
      %p52 = scmp.eq.s32.totalorder %s20, 0
      %p53 = por %p51, %p52
      %p54 = scmp.ne.s32.totalorder %s40, %s41
      %p55 = scmp.eq.s32.totalorder %s21, 2
      %p56 = por %p54, %p55
      %p58 = scmp.ne.s32.totalorder %s41, %s57
      %p59 = scmp.eq.s32.totalorder %s21, 0
      %p60 = por %p58, %p59
      %s61 = ssub.s32 %s23, %s30
      %p62 = scmp.eq.s32.totalorder %s61, 0
      %s64 = sadd.s32 %s63, 1
      %s65 = scalar_select %p62, %s63, %s64
      %p68 = pneg %p62
      %p69 = scmp.eq.s32.totalorder %s15, 2
      %p70 = por %p68, %p69
      %p71 = scmp.ne.s32.totalorder %s63, %s66
      %p72 = scmp.eq.s32.totalorder %s15, 0
      %p73 = por %p71, %p72
      %p74 = scmp.ne.s32.totalorder %s63, %s66
      %p75 = scmp.eq.s32.totalorder %s20, 2
      %p76 = por %p74, %p75
      %p77 = scmp.ne.s32.totalorder %s66, %s67
      %p78 = scmp.eq.s32.totalorder %s20, 0
      %p79 = por %p77, %p78
      %p80 = scmp.ne.s32.totalorder %s66, %s67
      %p81 = scmp.eq.s32.totalorder %s21, 2
      %p82 = por %p80, %p81
      %p84 = scmp.ne.s32.totalorder %s67, %s83
      %p85 = scmp.eq.s32.totalorder %s21, 0
      %p86 = por %p84, %p85
      %s87 = ssub.s32 %s22, %s34
      %p88 = scmp.eq.s32.totalorder %s87, 0
      %s90 = sadd.s32 %s89, 1
      %s91 = scalar_select %p88, %s89, %s90
      %p94 = pneg %p88
      %p95 = scmp.eq.s32.totalorder %s15, 2
      %p96 = por %p94, %p95
      %p97 = scmp.ne.s32.totalorder %s89, %s92
      %p98 = scmp.eq.s32.totalorder %s15, 0
      %p99 = por %p97, %p98
      %p100 = scmp.ne.s32.totalorder %s89, %s92
      %p101 = scmp.eq.s32.totalorder %s20, 2
      %p102 = por %p100, %p101
      %p103 = scmp.ne.s32.totalorder %s92, %s93
      %p104 = scmp.eq.s32.totalorder %s20, 0
      %p105 = por %p103, %p104
      %p106 = scmp.ne.s32.totalorder %s92, %s93
      %p107 = scmp.eq.s32.totalorder %s21, 2
      %p108 = por %p106, %p107
      %p110 = scmp.ne.s32.totalorder %s93, %s109
      %p111 = scmp.eq.s32.totalorder %s21, 0
      %p112 = por %p110, %p111
      %s114 = sadd.s32 %s113, 1
      %p117 = scmp.eq.s32.totalorder %s15, 2
      %p118 = scmp.ne.s32.totalorder %s113, %s115
      %p119 = scmp.eq.s32.totalorder %s15, 0
      %p120 = por %p118, %p119
      %p121 = scmp.ne.s32.totalorder %s113, %s115
      %p122 = scmp.eq.s32.totalorder %s20, 2
      %p123 = por %p121, %p122
      %p124 = scmp.ne.s32.totalorder %s115, %s116
      %p125 = scmp.eq.s32.totalorder %s20, 0
      %p126 = por %p124, %p125
      %p127 = scmp.ne.s32.totalorder %s115, %s116
      %p128 = scmp.eq.s32.totalorder %s21, 2
      %p129 = por %p127, %p128
      %p131 = scmp.ne.s32.totalorder %s116, %s130
      %p132 = scmp.eq.s32.totalorder %s21, 0
      %p133 = por %p131, %p132
      %s135 = sadd.s32 %s134, 1
      %p138 = scmp.eq.s32.totalorder %s15, 2
      %p139 = scmp.ne.s32.totalorder %s134, %s136
      %p140 = scmp.eq.s32.totalorder %s15, 0
      %p141 = por %p139, %p140
      %p142 = scmp.ne.s32.totalorder %s134, %s136
      %p143 = scmp.eq.s32.totalorder %s20, 2
      %p144 = por %p142, %p143
      %p145 = scmp.ne.s32.totalorder %s136, %s137
      %p146 = scmp.eq.s32.totalorder %s20, 0
      %p147 = por %p145, %p146
      %p148 = scmp.ne.s32.totalorder %s136, %s137
      %p149 = scmp.eq.s32.totalorder %s21, 2
      %p150 = por %p148, %p149
      %p152 = scmp.ne.s32.totalorder %s137, %s151
      %p153 = scmp.eq.s32.totalorder %s21, 0
      %p154 = por %p152, %p153
      %s156 = sadd.s32 %s155, 1
      %p159 = scmp.eq.s32.totalorder %s15, 2
      %p160 = scmp.ne.s32.totalorder %s155, %s157
      %p161 = scmp.eq.s32.totalorder %s15, 0
      %p162 = por %p160, %p161
      %p163 = scmp.ne.s32.totalorder %s155, %s157
      %p164 = scmp.eq.s32.totalorder %s20, 2
      %p165 = por %p163, %p164
      %p166 = scmp.ne.s32.totalorder %s157, %s158
      %p167 = scmp.eq.s32.totalorder %s20, 0
      %p168 = por %p166, %p167
      %p169 = scmp.ne.s32.totalorder %s157, %s158
      %p170 = scmp.eq.s32.totalorder %s21, 2
      %p171 = por %p169, %p170
      %p173 = scmp.ne.s32.totalorder %s158, %s172
      %p174 = scmp.eq.s32.totalorder %s21, 0
      %p175 = por %p173, %p174
      %s177 = sadd.s32 %s176, 1
      %p180 = scmp.eq.s32.totalorder %s15, 2
      %p181 = scmp.ne.s32.totalorder %s176, %s178
      %p182 = scmp.eq.s32.totalorder %s15, 0
      %p183 = por %p181, %p182
      %p184 = scmp.ne.s32.totalorder %s176, %s178
      %p185 = scmp.eq.s32.totalorder %s20, 2
      %p186 = por %p184, %p185
      %p187 = scmp.ne.s32.totalorder %s178, %s179
      %p188 = scmp.eq.s32.totalorder %s20, 0
      %p189 = por %p187, %p188
      %p190 = scmp.ne.s32.totalorder %s178, %s179
      %p191 = scmp.eq.s32.totalorder %s21, 2
      %p192 = por %p190, %p191
      %p194 = scmp.ne.s32.totalorder %s179, %s193
      %p195 = scmp.eq.s32.totalorder %s21, 0
      %p196 = por %p194, %p195
      %s198 = sadd.s32 %s197, 1
      %p201 = scmp.eq.s32.totalorder %s15, 2
      %p202 = scmp.ne.s32.totalorder %s197, %s199
      %p203 = scmp.eq.s32.totalorder %s15, 0
      %p204 = por %p202, %p203
      %p205 = scmp.ne.s32.totalorder %s197, %s199
      %p206 = scmp.eq.s32.totalorder %s20, 2
      %p207 = por %p205, %p206
      %p208 = scmp.ne.s32.totalorder %s199, %s200
      %p209 = scmp.eq.s32.totalorder %s20, 0
      %p210 = por %p208, %p209
      %p211 = scmp.ne.s32.totalorder %s199, %s200
      %p212 = scmp.eq.s32.totalorder %s21, 2
      %p213 = por %p211, %p212
      %p215 = scmp.ne.s32.totalorder %s200, %s214
      %p216 = scmp.eq.s32.totalorder %s21, 0
      %p217 = por %p215, %p216
      %s218 = ssub.s32 %s22, %s34
      %p219 = scmp.eq.s32.totalorder %s218, 0
      %s221 = sadd.s32 %s220, 1
      %s222 = scalar_select %p219, %s220, %s221
      %p225 = pneg %p219
      %p226 = scmp.eq.s32.totalorder %s15, 2
      %p227 = por %p225, %p226
      %p228 = scmp.ne.s32.totalorder %s220, %s223
      %p229 = scmp.eq.s32.totalorder %s15, 0
      %p230 = por %p228, %p229
      %p231 = scmp.ne.s32.totalorder %s220, %s223
      %p232 = scmp.eq.s32.totalorder %s20, 2
      %p233 = por %p231, %p232
      %p234 = scmp.ne.s32.totalorder %s223, %s224
      %p235 = scmp.eq.s32.totalorder %s20, 0
      %p236 = por %p234, %p235
      %p237 = scmp.ne.s32.totalorder %s223, %s224
      %p238 = scmp.eq.s32.totalorder %s21, 2
      %p239 = por %p237, %p238
      %p241 = scmp.ne.s32.totalorder %s224, %s240
      %p242 = scmp.eq.s32.totalorder %s21, 0
      %p243 = por %p241, %p242
      %p244 = scmp.le.s32.totalorder 1, %s15
      %p245 = scmp.lt.s32.totalorder %s15, 4
      %p246 = pnand %p244, %p245
      %p247 = pneg %p246
      // Predicated region
      $region9: #{tpu_custom_call.1} parent=5 // pred_check
        _
      $region10: #{tpu_custom_call.1} parent=5 // pred_check_branch
        %249 = sbr.rel (%p246) target = $region12
      $region11: #{tpu_custom_call.1} parent=5 // pred_region
        %s250 = ssub.s32 %s15, 1
        // Predicated region
        $region13: #{tpu_custom_call.1} parent=11 // pred_check
          %p251 = pneg %p105
        $region14: #{tpu_custom_call.1} parent=11 // pred_check_branch
          %253 = sbr.rel (%p251) target = $region16
        $region15: #{tpu_custom_call.1} parent=11 // pred_region
          %p254 = scmp.lt.s32.totalorder %s24, 0
          %s255 = scalar_select %p254, %s24, 0
          %s256 = smul.addr %s255, 8
          %s257 = scalar_lea.vmem %s2, %s256
        $region16: #{tpu_custom_call.1} parent=11 // pred_fallthru
          _
        // Predicated region
        $region17: #{tpu_custom_call.1} parent=11 // pred_check
          %p258 = pneg %p126
        $region18: #{tpu_custom_call.1} parent=11 // pred_check_branch
          %260 = sbr.rel (%p258) target = $region20
        $region19: #{tpu_custom_call.1} parent=11 // pred_region
          _
        $region20: #{tpu_custom_call.1} parent=11 // pred_fallthru
          _
        // Predicated region
        $region21: #{tpu_custom_call.1} parent=11 // pred_check
          %p261 = pneg %p147
        $region22: #{tpu_custom_call.1} parent=11 // pred_check_branch
          %263 = sbr.rel (%p261) target = $region24
        $region23: #{tpu_custom_call.1} parent=11 // pred_region
          _
        $region24: #{tpu_custom_call.1} parent=11 // pred_fallthru
          _
        // Predicated region
        $region25: #{tpu_custom_call.1} parent=11 // pred_check
          %p264 = pneg %p168
        $region26: #{tpu_custom_call.1} parent=11 // pred_check_branch
          %266 = sbr.rel (%p264) target = $region28
        $region27: #{tpu_custom_call.1} parent=11 // pred_region
          _
        $region28: #{tpu_custom_call.1} parent=11 // pred_fallthru
          _
        // Predicated region
        $region29: #{tpu_custom_call.1} parent=11 // pred_check
          %p267 = pneg %p189
        $region30: #{tpu_custom_call.1} parent=11 // pred_check_branch
          %269 = sbr.rel (%p267) target = $region32
        $region31: #{tpu_custom_call.1} parent=11 // pred_region
          _
        $region32: #{tpu_custom_call.1} parent=11 // pred_fallthru
          _
        // Predicated region
        $region33: #{tpu_custom_call.1} parent=11 // pred_check
          %p270 = pneg %p210
        $region34: #{tpu_custom_call.1} parent=11 // pred_check_branch
          %272 = sbr.rel (%p270) target = $region36
        $region35: #{tpu_custom_call.1} parent=11 // pred_region
          _
        $region36: #{tpu_custom_call.1} parent=11 // pred_fallthru
          _
      $region12: #{tpu_custom_call.1} parent=5 // pred_fallthru
        _
      %p273 = scmp.lt.s32.totalorder %s15, 3
      // Predicated region
      $region37: #{tpu_custom_call.1} parent=5 // pred_check
        %p274 = pneg %p273
      $region38: #{tpu_custom_call.1} parent=5 // pred_check_branch
        %276 = sbr.rel (%p274) target = $region40
      $region39: #{tpu_custom_call.1} parent=5 // pred_region
        // Predicated region
        $region41: #{tpu_custom_call.1} parent=39 // pred_check
          %p277 = pneg %p47
        $region42: #{tpu_custom_call.1} parent=39 // pred_check_branch
          %279 = sbr.rel (%p277) target = $region44
        $region43: #{tpu_custom_call.1} parent=39 // pred_region
          %p280 = scmp.lt.s32.totalorder %s23, 2
          %s281 = scalar_select %p280, %s23, 2
          %s282 = scalar_lea.vmem %s0, %s281
        $region44: #{tpu_custom_call.1} parent=39 // pred_fallthru
          _
        // Predicated region
        $region45: #{tpu_custom_call.1} parent=39 // pred_check
          %p283 = pneg %p73
        $region46: #{tpu_custom_call.1} parent=39 // pred_check_branch
          %285 = sbr.rel (%p283) target = $region48
        $region47: #{tpu_custom_call.1} parent=39 // pred_region
          %s286 = smul.u32 16, %s23
          %p287 = scmp.lt.s32.totalorder %s286, 47
          %s288 = scalar_select %p287, %s286, 47
          %s289 = smul.addr %s288, 4
          %s290 = scalar_lea.vmem %s1, %s289
          %s291 = smul.u32 16, %s23
        $region48: #{tpu_custom_call.1} parent=39 // pred_fallthru
          _
      $region40: #{tpu_custom_call.1} parent=5 // pred_fallthru
        _
      %p292 = scmp.le.s32.totalorder 1, %s15
      %p293 = scmp.lt.s32.totalorder %s15, 4
      %p294 = pnand %p292, %p293
      %p295 = pneg %p294
      // Predicated region
      $region49: #{tpu_custom_call.1} parent=5 // pred_check
        _
      $region50: #{tpu_custom_call.1} parent=5 // pred_check_branch
        %297 = sbr.rel (%p294) target = $region52
      $region51: #{tpu_custom_call.1} parent=5 // pred_region
        %s298 = ssub.s32 %s15, 1
        %p299 = scmp.lt.s32.totalorder %s25, 2
        %s300 = scalar_select %p299, %s25, 2
        %s301 = scalar_lea.vmem %s0, %s300
        %p302 = pneg %p53
        %p303 = pneg %p50
        %s304 = smul.u32 16, %s25
        %p305 = scmp.lt.s32.totalorder %s304, 47
        %s306 = scalar_select %p305, %s304, 47
        %s307 = smul.addr %s306, 4
        %s308 = scalar_lea.vmem %s1, %s307
        %p309 = pneg %p79
        %p310 = pneg %p76
        %p311 = scmp.lt.s32.totalorder %s24, 0
        %s312 = scalar_select %p311, %s24, 0
        %s313 = smul.addr %s312, 8
        %s314 = scalar_lea.vmem %s2, %s313
        %p315 = pneg %p105
        %p316 = pneg %p102
        %p317 = pneg %p126
        %p318 = pneg %p123
        %p319 = pneg %p147
        %p320 = pneg %p144
        %p321 = pneg %p168
        %p322 = pneg %p165
        %p323 = pneg %p189
        %p324 = pneg %p186
        %p325 = pneg %p210
        %p326 = pneg %p207
        %p327 = pneg %p236
        %p328 = pneg %p233
        %p329 = scmp.lt.s32.totalorder %s25, 2
        %s330 = scalar_select %p329, %s25, 2
        %s331 = scalar_lea.vmem %s0, %s330
        %s332 = smul.u32 16, %s25
        %p333 = scmp.lt.s32.totalorder %s332, 47
        %s334 = scalar_select %p333, %s332, 47
        %s335 = smul.addr %s334, 4
        %s336 = scalar_lea.vmem %s1, %s335
        %s337 = smul.u32 16, %s25
        %p338 = scmp.lt.s32.totalorder %s24, 0
        %s339 = scalar_select %p338, %s24, 0
        %s340 = smul.addr %s339, 8
        %s341 = scalar_lea.vmem %s2, %s340
        %s343 = smul.u32 %s24, 8
        %p344 = scmp.eq.s32.totalorder %s25, 0
        // Predicated region
        $region53: #{tpu_custom_call.1} parent=51 // pred_check
          %p345 = pneg %p344
        $region54: #{tpu_custom_call.1} parent=51 // pred_check_branch
          %347 = sbr.rel (%p345) target = $region56
        $region55: #{tpu_custom_call.1} parent=51 // pred_region
          %348 = vst [vmem:[#allocation2] sm:$0xff] 0.0
        $region56: #{tpu_custom_call.1} parent=51 // pred_fallthru
          _
        %v349 = vld [vmem:[%s331] sm:$0x1]
        %v350 = vlaneseq
        %v351 = vshrl.u32 %v350, 7
        %v352 = vstv %s343
        %v353 = vadd.s32 %v352, %v351
        %v354 = vlaneseq
        %v355 = vshrl.u32 %v354, 7
        %v356 = vsub.s32 0, %v355
        %v357 = vrot.slane %v349, %v356
        %vm358 = vcmp.eq.s32.totalorder %v353, %v357
        %v359 = vsel %vm358, 1, 0
        %v360 = vcvt.s32.f32 %v359
        %v361 = vpack.c.bf16 %v360, %v360
        %v362 = vld [vmem:[%s336] sm:$0xf]
        %v363 = vld [vmem:[%s336 + $0x4] sm:$0xf]
        %v364 = vld [vmem:[%s336 + $0x8] sm:$0xf]
        %v365 = vld [vmem:[%s336 + $0xc] sm:$0xf]
        %v366 = vld [vmem:[%s336 + $0x10] sm:$0xf]
        %v367 = vld [vmem:[%s336 + $0x14] sm:$0xf]
        %v368 = vld [vmem:[%s336 + $0x18] sm:$0xf]
        %v369 = vld [vmem:[%s336 + $0x1c] sm:$0xf]
        %v370 = vld [vmem:[%s336 + $0x20] sm:$0xf]
        %v371 = vld [vmem:[%s336 + $0x24] sm:$0xf]
        %v372 = vld [vmem:[%s336 + $0x28] sm:$0xf]
        %v373 = vld [vmem:[%s336 + $0x2c] sm:$0xf]
        %v374 = vld [vmem:[%s336 + $0x30] sm:$0xf]
        %v375 = vld [vmem:[%s336 + $0x34] sm:$0xf]
        %v376 = vld [vmem:[%s336 + $0x38] sm:$0xf]
        %v377 = vld [vmem:[%s336 + $0x3c] sm:$0xf]
        %v378 = vld [vmem:[%s4] sm:$0xf]
        %v395 = vunpack.c.l.b16 %v362
        %v396 = vunpack.c.l.b16 %v363
        %v397 = vunpack.c.l.b16 %v364
        %v398 = vunpack.c.l.b16 %v365
        %v399 = vunpack.c.l.b16 %v366
        %v400 = vunpack.c.l.b16 %v367
        %v401 = vunpack.c.l.b16 %v368
        %v402 = vunpack.c.l.b16 %v369
        %v403 = vunpack.c.l.b16 %v370
        %v404 = vunpack.c.l.b16 %v371
        %v405 = vunpack.c.l.b16 %v372
        %v406 = vunpack.c.l.b16 %v373
        %v407 = vunpack.c.l.b16 %v374
        %v408 = vunpack.c.l.b16 %v375
        %v409 = vunpack.c.l.b16 %v376
        %v410 = vunpack.c.l.b16 %v377
        %v411 = vpack.c.b16 %v396, %v395
        %v412 = vpack.c.b16 %v398, %v397
        %v413 = vpack.c.b16 %v400, %v399
        %v414 = vpack.c.b16 %v402, %v401
        %v415 = vpack.c.b16 %v404, %v403
        %v416 = vpack.c.b16 %v406, %v405
        %v417 = vpack.c.b16 %v408, %v407
        %v418 = vpack.c.b16 %v410, %v409
        %vm419 = vcmask 56320
        %v421 = vsel %vm419, %v411, 0
        %v424 = vsel %vm419, %v412, 0
        %v427 = vsel %vm419, %v413, 0
        %v430 = vsel %vm419, %v414, 0
        %v433 = vsel %vm419, %v415, 0
        %v436 = vsel %vm419, %v416, 0
        %v439 = vsel %vm419, %v417, 0
        %v442 = vsel %vm419, %v418, 0
        %vm444 = vcmask 1042432
        %vm445 = vcmask 1043456
        %v446 = vsel %vm444, 4294967295, 65535
        %v447 = vsel %vm445, %v446, 0
        %v449 = vand.u32 %v378, %v447
        %451 = vmatprep.subr.bf16.mxu0 0
        %452 = vmatpush1.bf16.msra.mxu0 %v449
        %453 = vmatprep.subr.bf16.mxu0 0
        %454 = vmatpush1.bf16.msra.mxu0 0
        %455 = vmatprep.subr.bf16.mxu0 0
        %456 = vmatpush1.bf16.msra.mxu0 0
        %457 = vmatprep.subr.bf16.mxu0 0
        %458 = vmatpush1.bf16.msra.mxu0 0
        %459 = vmatprep.subr.bf16.mxu0 0
        %460 = vmatpush1.bf16.msra.mxu0 0
        %461 = vmatprep.subr.bf16.mxu0 0
        %462 = vmatpush1.bf16.msra.mxu0 0
        %463 = vmatprep.subr.bf16.mxu0 0
        %464 = vmatpush1.bf16.msra.mxu0 0
        %465 = vmatprep.subr.bf16.mxu0 0
        %466 = vmatpush1.bf16.msra.mxu0 0
        %467 = vmatprep.subr.bf16.mxu0 0
        %468 = vmatpush1.bf16.msra.mxu0 0
        %469 = vmatprep.subr.bf16.mxu0 0
        %470 = vmatpush1.bf16.msra.mxu0 0
        %471 = vmatprep.subr.bf16.mxu0 0
        %472 = vmatpush1.bf16.msra.mxu0 0
        %473 = vmatprep.subr.bf16.mxu0 0
        %474 = vmatpush1.bf16.msra.mxu0 0
        %475 = vmatprep.subr.bf16.mxu0 0
        %476 = vmatpush1.bf16.msra.mxu0 0
        %477 = vmatprep.subr.bf16.mxu0 0
        %478 = vmatpush1.bf16.msra.mxu0 0
        %479 = vmatprep.subr.bf16.mxu0 0
        %480 = vmatpush1.bf16.msra.mxu0 0
        %481 = vmatprep.subr.bf16.mxu0 0
        %482 = vmatpush1.bf16.msra.mxu0 0
        %483 = vmatprep.mubr.bf16.mxu0 0
        %484 = vmatmul.mubr.bf16.gmra.mrb[0].mxu0 %v421
        %v485 = vpop.f32.mrb[0].mxu0
        %v486 = vadd.f32 0.0, %v485
        %v487 = vpop.f32.mrb[0].mxu0
        %v488 = vpop.f32.mrb[0].mxu0
        %v489 = vadd.f32 0.0, %v488
        %v490 = vpop.f32.mrb[0].mxu0
        %491 = vmatprep.mubr.bf16.mxu0 0
        %492 = vmatmul.mubr.bf16.gmra.mrb[0].mxu0 %v424
        %v493 = vpop.f32.mrb[0].mxu0
        %v494 = vadd.f32 0.0, %v493
        %v495 = vpop.f32.mrb[0].mxu0
        %v496 = vpop.f32.mrb[0].mxu0
        %v497 = vadd.f32 0.0, %v496
        %v498 = vpop.f32.mrb[0].mxu0
        %499 = vmatprep.mubr.bf16.mxu0 0
        %500 = vmatmul.mubr.bf16.gmra.mrb[0].mxu0 %v427
        %v501 = vpop.f32.mrb[0].mxu0
        %v502 = vadd.f32 0.0, %v501
        %v503 = vpop.f32.mrb[0].mxu0
        %v504 = vpop.f32.mrb[0].mxu0
        %v505 = vadd.f32 0.0, %v504
        %v506 = vpop.f32.mrb[0].mxu0
        %507 = vmatprep.mubr.bf16.mxu0 0
        %508 = vmatmul.mubr.bf16.gmra.mrb[0].mxu0 %v430
        %v509 = vpop.f32.mrb[0].mxu0
        %v510 = vadd.f32 0.0, %v509
        %v511 = vpop.f32.mrb[0].mxu0
        %v512 = vpop.f32.mrb[0].mxu0
        %v513 = vadd.f32 0.0, %v512
        %v514 = vpop.f32.mrb[0].mxu0
        %515 = vmatprep.mubr.bf16.mxu0 0
        %516 = vmatmul.mubr.bf16.gmra.mrb[0].mxu0 %v433
        %v517 = vpop.f32.mrb[0].mxu0
        %v518 = vadd.f32 0.0, %v517
        %v519 = vpop.f32.mrb[0].mxu0
        %v520 = vpop.f32.mrb[0].mxu0
        %v521 = vadd.f32 0.0, %v520
        %v522 = vpop.f32.mrb[0].mxu0
        %523 = vmatprep.mubr.bf16.mxu0 0
        %524 = vmatmul.mubr.bf16.gmra.mrb[0].mxu0 %v436
        %v525 = vpop.f32.mrb[0].mxu0
        %v526 = vadd.f32 0.0, %v525
        %v527 = vpop.f32.mrb[0].mxu0
        %v528 = vpop.f32.mrb[0].mxu0
        %v529 = vadd.f32 0.0, %v528
        %v530 = vpop.f32.mrb[0].mxu0
        %531 = vmatprep.mubr.bf16.mxu0 0
        %532 = vmatmul.mubr.bf16.gmra.mrb[0].mxu0 %v439
        %v533 = vpop.f32.mrb[0].mxu0
        %v534 = vadd.f32 0.0, %v533
        %v535 = vpop.f32.mrb[0].mxu0
        %v536 = vpop.f32.mrb[0].mxu0
        %v537 = vadd.f32 0.0, %v536
        %v538 = vpop.f32.mrb[0].mxu0
        %539 = vmatprep.mubr.bf16.mxu0 0
        %540 = vmatmul.mubr.bf16.gmra.mrb[0].mxu0 %v442
        %v541 = vpop.f32.mrb[0].mxu0
        %v542 = vadd.f32 0.0, %v541
        %v543 = vpop.f32.mrb[0].mxu0
        %v544 = vpop.f32.mrb[0].mxu0
        %v545 = vadd.f32 0.0, %v544
        %v546 = vpop.f32.mrb[0].mxu0
        %547 = vdwg.mxu0
        %v548 = vld [vmem:[#allocation2] sm:$0xff]
        %v549 = vpack.c.bf16 %v489, %v486
        %v550 = vpack.c.bf16 %v497, %v494
        %v551 = vpack.c.bf16 %v505, %v502
        %v552 = vpack.c.bf16 %v513, %v510
        %v553 = vpack.c.bf16 %v521, %v518
        %v554 = vpack.c.bf16 %v529, %v526
        %v555 = vpack.c.bf16 %v537, %v534
        %v556 = vpack.c.bf16 %v545, %v542
        %557 = vmatprep.subr.bf16.mxu0 0
        %558 = vmatpush1.bf16.msra.mxu0 %v549
        %559 = vmatprep.subr.bf16.mxu0 0
        %560 = vmatpush1.bf16.msra.mxu0 %v550
        %561 = vmatprep.subr.bf16.mxu0 0
        %562 = vmatpush1.bf16.msra.mxu0 %v551
        %563 = vmatprep.subr.bf16.mxu0 0
        %564 = vmatpush1.bf16.msra.mxu0 %v552
        %565 = vmatprep.subr.bf16.mxu0 0
        %566 = vmatpush1.bf16.msra.mxu0 %v553
        %567 = vmatprep.subr.bf16.mxu0 0
        %568 = vmatpush1.bf16.msra.mxu0 %v554
        %569 = vmatprep.subr.bf16.mxu0 0
        %570 = vmatpush1.bf16.msra.mxu0 %v555
        %571 = vmatprep.subr.bf16.mxu0 0
        %572 = vmatpush1.bf16.msra.mxu0 %v556
        %573 = vmatprep.subr.bf16.mxu0 0
        %574 = vmatpush1.bf16.msra.mxu0 0
        %575 = vmatprep.subr.bf16.mxu0 0
        %576 = vmatpush1.bf16.msra.mxu0 0
        %577 = vmatprep.subr.bf16.mxu0 0
        %578 = vmatpush1.bf16.msra.mxu0 0
        %579 = vmatprep.subr.bf16.mxu0 0
        %580 = vmatpush1.bf16.msra.mxu0 0
        %581 = vmatprep.subr.bf16.mxu0 0
        %582 = vmatpush1.bf16.msra.mxu0 0
        %583 = vmatprep.subr.bf16.mxu0 0
        %584 = vmatpush1.bf16.msra.mxu0 0
        %585 = vmatprep.subr.bf16.mxu0 0
        %586 = vmatpush1.bf16.msra.mxu0 0
        %587 = vmatprep.subr.bf16.mxu0 0
        %588 = vmatpush1.bf16.msra.mxu0 0
        %589 = vmatprep.mubr.bf16.mxu0 0
        %590 = vmatmul.mubr.bf16.gmra.mrb[0].mxu0 %v361
        %v591 = vpop.f32.mrb[0].mxu0
        %v592 = vadd.f32 0.0, %v591
        %v593 = vpop.f32.mrb[0].mxu0
        %v594 = vpop.f32.mrb[0].mxu0
        %v595 = vpop.f32.mrb[0].mxu0
        %596 = vdwg.mxu0
        %v597 = vadd.f32 %v548, %v592
        %598 = vst [vmem:[#allocation2] sm:$0xff] %v597
        %p599 = scmp.eq.s32.totalorder %s25, 2
        // Predicated region
        $region57: #{tpu_custom_call.1} parent=51 // pred_check
          %p600 = pneg %p599
        $region58: #{tpu_custom_call.1} parent=51 // pred_check_branch
          %602 = sbr.rel (%p600) target = $region60
        $region59: #{tpu_custom_call.1} parent=51 // pred_region
          %v603 = vld [vmem:[#allocation2] sm:$0xff]
          %v604 = vmax.f32 %v603, 1.0
          %606 = vset.pattern.permute.xlu0 32
          %607 = vperm.xlu0 %606, %v604
          %v608 = vpop.permute.xlu0 %607
          %v610 = vrcp.pop %v608
          %v611 = vmul.f32 %v603, %v610
          %v612 = vld [vmem:[%s341] sm:$0xff]
          %v613 = vld [vmem:[%s3] sm:$0x1f]
          %vm614 = vcmask 39936
          %v616 = vsel %vm614, %v612, 0
          %vm618 = vcmask 1044480
          %v620 = vsel %vm618, %v613, 0
          %622 = vmatprep.subr.mxu0 0.0
          %623 = vmatpush1.msra.mxu0 %v620
          %624 = vmatprep.subr.mxu0 0.0
          %625 = vmatpush1.msra.mxu0 0.0
          %626 = vmatprep.subr.mxu0 0.0
          %627 = vmatpush1.msra.mxu0 0.0
          %628 = vmatprep.subr.mxu0 0.0
          %629 = vmatpush1.msra.mxu0 0.0
          %630 = vmatprep.subr.mxu0 0.0
          %631 = vmatpush1.msra.mxu0 0.0
          %632 = vmatprep.subr.mxu0 0.0
          %633 = vmatpush1.msra.mxu0 0.0
          %634 = vmatprep.subr.mxu0 0.0
          %635 = vmatpush1.msra.mxu0 0.0
          %636 = vmatprep.subr.mxu0 0.0
          %637 = vmatpush1.msra.mxu0 0.0
          %638 = vmatprep.subr.mxu0 0.0
          %639 = vmatpush1.msra.mxu0 0.0
          %640 = vmatprep.subr.mxu0 0.0
          %641 = vmatpush1.msra.mxu0 0.0
          %642 = vmatprep.subr.mxu0 0.0
          %643 = vmatpush1.msra.mxu0 0.0
          %644 = vmatprep.subr.mxu0 0.0
          %645 = vmatpush1.msra.mxu0 0.0
          %646 = vmatprep.subr.mxu0 0.0
          %647 = vmatpush1.msra.mxu0 0.0
          %648 = vmatprep.subr.mxu0 0.0
          %649 = vmatpush1.msra.mxu0 0.0
          %650 = vmatprep.subr.mxu0 0.0
          %651 = vmatpush1.msra.mxu0 0.0
          %652 = vmatprep.subr.mxu0 0.0
          %653 = vmatpush1.msra.mxu0 0.0
          %654 = vmatprep.subr.mxu0 0.0
          %655 = vmatpush1.msra.mxu0 0.0
          %656 = vmatprep.subr.mxu0 0.0
          %657 = vmatpush1.msra.mxu0 0.0
          %658 = vmatprep.subr.mxu0 0.0
          %659 = vmatpush1.msra.mxu0 0.0
          %660 = vmatprep.subr.mxu0 0.0
          %661 = vmatpush1.msra.mxu0 0.0
          %662 = vmatprep.subr.mxu0 0.0
          %663 = vmatpush1.msra.mxu0 0.0
          %664 = vmatprep.subr.mxu0 0.0
          %665 = vmatpush1.msra.mxu0 0.0
          %666 = vmatprep.subr.mxu0 0.0
          %667 = vmatpush1.msra.mxu0 0.0
          %668 = vmatprep.subr.mxu0 0.0
          %669 = vmatpush1.msra.mxu0 0.0
          %670 = vmatprep.subr.mxu0 0.0
          %671 = vmatpush1.msra.mxu0 0.0
          %672 = vmatprep.subr.mxu0 0.0
          %673 = vmatpush1.msra.mxu0 0.0
          %674 = vmatprep.subr.mxu0 0.0
          %675 = vmatpush1.msra.mxu0 0.0
          %676 = vmatprep.subr.mxu0 0.0
          %677 = vmatpush1.msra.mxu0 0.0
          %678 = vmatprep.subr.mxu0 0.0
          %679 = vmatpush1.msra.mxu0 0.0
          %680 = vmatprep.subr.mxu0 0.0
          %681 = vmatpush1.msra.mxu0 0.0
          %682 = vmatprep.subr.mxu0 0.0
          %683 = vmatpush1.msra.mxu0 0.0
          %684 = vmatprep.subr.mxu0 0.0
          %685 = vmatpush1.msra.mxu0 0.0
          %686 = vmatprep.mubr.f32.mxu0 0.0
          %687 = vmatmul.mubr.f32.gmra.mrb[0].mxu0 %v616
          %v688 = vpop.f32.mrb[0].mxu0
          %v689 = vadd.f32 %v611, %v688
          %v690 = vpop.f32.mrb[0].mxu0
          %691 = vdwg.mxu0
          %v692 = vld [vmem:[%s5] sm:$0x1]
          %v694 = vlaneseq
          %v695 = vshrl.u32 %v694, 7
          %v696 = vsub.s32 0, %v695
          %v697 = vrot.slane %v692, %v696
          %v699 = vadd.f32 %v689, %v697
          %v700 = vmax.f32 %v699, 0.0
          %v701 = vpack.c.bf16 %v700, %v700
          %v702 = vld [vmem:[%s6] sm:$0xf]
          %v703 = vld [vmem:[%s6 + $0x4] sm:$0xf]
          %v704 = vld [vmem:[%s6 + $0x8] sm:$0xf]
          %v705 = vld [vmem:[%s6 + $0xc] sm:$0xf]
          %v706 = vld [vmem:[%s6 + $0x10] sm:$0xf]
          %v707 = vld [vmem:[%s6 + $0x14] sm:$0xf]
          %v708 = vld [vmem:[%s6 + $0x18] sm:$0xf]
          %v709 = vld [vmem:[%s6 + $0x1c] sm:$0xf]
          %v710 = vld [vmem:[%s6 + $0x20] sm:$0xf]
          %v711 = vld [vmem:[%s6 + $0x24] sm:$0xf]
          %v712 = vld [vmem:[%s6 + $0x28] sm:$0xf]
          %v713 = vld [vmem:[%s6 + $0x2c] sm:$0xf]
          %v714 = vld [vmem:[%s6 + $0x30] sm:$0xf]
          %v715 = vld [vmem:[%s6 + $0x34] sm:$0xf]
          %v716 = vld [vmem:[%s6 + $0x38] sm:$0xf]
          %v717 = vld [vmem:[%s6 + $0x3c] sm:$0xf]
          %v718 = vld [vmem:[%s7] sm:$0x1]
          %v720 = vlaneseq
          %v721 = vshrl.u32 %v720, 7
          %v722 = vsub.s32 0, %v721
          %v723 = vrot.slane %v718, %v722
          %v741 = vunpack.c.l.b16 %v702
          %v742 = vunpack.c.l.b16 %v703
          %v743 = vunpack.c.l.b16 %v704
          %v744 = vunpack.c.l.b16 %v705
          %v745 = vunpack.c.l.b16 %v706
          %v746 = vunpack.c.l.b16 %v707
          %v747 = vunpack.c.l.b16 %v708
          %v748 = vunpack.c.l.b16 %v709
          %v749 = vunpack.c.l.b16 %v710
          %v750 = vunpack.c.l.b16 %v711
          %v751 = vunpack.c.l.b16 %v712
          %v752 = vunpack.c.l.b16 %v713
          %v753 = vunpack.c.l.b16 %v714
          %v754 = vunpack.c.l.b16 %v715
          %v755 = vunpack.c.l.b16 %v716
          %v756 = vunpack.c.l.b16 %v717
          %v757 = vpack.c.b16 %v742, %v741
          %v758 = vpack.c.b16 %v744, %v743
          %v759 = vpack.c.b16 %v746, %v745
          %v760 = vpack.c.b16 %v748, %v747
          %v761 = vpack.c.b16 %v750, %v749
          %v762 = vpack.c.b16 %v752, %v751
          %v763 = vpack.c.b16 %v754, %v753
          %v764 = vpack.c.b16 %v756, %v755
          %773 = vmatprep.subr.bf16.mxu0 0
          %774 = vmatpush1.bf16.msra.mxu0 %v757
          %775 = vmatprep.subr.bf16.mxu0 0
          %776 = vmatpush1.bf16.msra.mxu0 %v758
          %777 = vmatprep.subr.bf16.mxu0 0
          %778 = vmatpush1.bf16.msra.mxu0 %v759
          %779 = vmatprep.subr.bf16.mxu0 0
          %780 = vmatpush1.bf16.msra.mxu0 %v760
          %781 = vmatprep.subr.bf16.mxu0 0
          %782 = vmatpush1.bf16.msra.mxu0 %v761
          %783 = vmatprep.subr.bf16.mxu0 0
          %784 = vmatpush1.bf16.msra.mxu0 %v762
          %785 = vmatprep.subr.bf16.mxu0 0
          %786 = vmatpush1.bf16.msra.mxu0 %v763
          %787 = vmatprep.subr.bf16.mxu0 0
          %788 = vmatpush1.bf16.msra.mxu0 %v764
          %789 = vmatprep.subr.bf16.mxu0 0
          %790 = vmatpush1.bf16.msra.mxu0 0
          %791 = vmatprep.subr.bf16.mxu0 0
          %792 = vmatpush1.bf16.msra.mxu0 0
          %793 = vmatprep.subr.bf16.mxu0 0
          %794 = vmatpush1.bf16.msra.mxu0 0
          %795 = vmatprep.subr.bf16.mxu0 0
          %796 = vmatpush1.bf16.msra.mxu0 0
          %797 = vmatprep.subr.bf16.mxu0 0
          %798 = vmatpush1.bf16.msra.mxu0 0
          %799 = vmatprep.subr.bf16.mxu0 0
          %800 = vmatpush1.bf16.msra.mxu0 0
          %801 = vmatprep.subr.bf16.mxu0 0
          %802 = vmatpush1.bf16.msra.mxu0 0
          %803 = vmatprep.subr.bf16.mxu0 0
          %804 = vmatpush1.bf16.msra.mxu0 0
          %805 = vmatprep.mubr.bf16.mxu0 0
          %806 = vmatmul.mubr.bf16.gmra.mrb[0].mxu0 %v701
          %v807 = vpop.f32.mrb[0].mxu0
          %v808 = vadd.f32 %v723, %v807
          %v809 = vpop.f32.mrb[0].mxu0
          %v810 = vpop.f32.mrb[0].mxu0
          %v811 = vpop.f32.mrb[0].mxu0
          %812 = vdwg.mxu0
          %813 = vst [vmem:[#allocation3] sm:$0xff] %v808
        $region60: #{tpu_custom_call.1} parent=51 // pred_fallthru
          _
        // Predicated region
        $region61: #{tpu_custom_call.1} parent=51 // pred_check
          %p814 = pneg %p233
        $region62: #{tpu_custom_call.1} parent=51 // pred_check_branch
          %816 = sbr.rel (%p814) target = $region64
        $region63: #{tpu_custom_call.1} parent=51 // pred_region
          %s818 = ssub.s32 128, 128
          %819 = vsyncadd [#allocation4], %s818
          %s820 = smul.addr %s24, 128
          %s821 = scalar_lea.hbm %s8, %s820
          %s823 = sshll.u32 [#allocation3], 4
          %s824 = int_to_ptr.vmem [resolvable:$true] %s823
          %826 = dma.vmem_to_hbm [thread:$0]  %s824, 128, %s821, [#allocation4]
        $region64: #{tpu_custom_call.1} parent=51 // pred_fallthru
          _
        // Predicated region
        $region65: #{tpu_custom_call.1} parent=51 // pred_check
          %p827 = pneg %p233
        $region66: #{tpu_custom_call.1} parent=51 // pred_check_branch
          %829 = sbr.rel (%p827) target = $region68
        $region67: #{tpu_custom_call.1} parent=51 // pred_region
          %830 = dma.done [#allocation4], 128
        $region68: #{tpu_custom_call.1} parent=51 // pred_fallthru
          _
      $region52: #{tpu_custom_call.1} parent=5 // pred_fallthru
        _
      %p831 = scmp.le.s32.totalorder 2, %s15
      // Predicated region
      $region69: #{tpu_custom_call.1} parent=5 // pred_check
        %p832 = pneg %p831
      $region70: #{tpu_custom_call.1} parent=5 // pred_check_branch
        %834 = sbr.rel (%p832) target = $region72
      $region71: #{tpu_custom_call.1} parent=5 // pred_region
        %s835 = ssub.s32 %s15, 2
      $region72: #{tpu_custom_call.1} parent=5 // pred_fallthru
        _
    $region6: #{tpu_custom_call.1} parent=1 // loop_footer
      %s19 = sadd.s32 1, %s15
    $region7: #{tpu_custom_call.1} parent=1 // loop_footer_branch
      %14 = sbr.rel target = $region3
    $region8: #{tpu_custom_call.1} parent=1 // loop_exit
      _
    %836 = vsyncpa [#allocation4], 1
    %s837 = scalar_lea.sflag [#allocation4], 1
    %838 = vsyncpa %s837, 1

</llo_original>
